<compile_context>
chip_gen: v5e
topology: v5e:2x2
jax: 0.10.0
libtpu: 0.0.40
codegen_flags: <defaults>
</compile_context>

<pallas_src>
import functools
from math import gcd

import jax
import jax.numpy as jnp
from jax.experimental import pallas as pl
from jax.experimental.pallas import tpu as pltpu


def _temporal_shift_kernel(x_ref, o_ref, *, num_frames, fold, shift_stride,
                           long_fold):
    x = x_ref[...]                                   # (R, C_blk), R = groups*T
    R, C = x.shape
    T = num_frames
    s = shift_stride

    # Row (time) index and column (channel) index as thin iotas; the boolean
    # masks broadcast to (R, C) only inside the selects.
    row = jax.lax.broadcasted_iota(jnp.int32, (R, 1), 0)
    if (T & (T - 1)) == 0:                           # cheap t = row mod T
        t_idx = jnp.bitwise_and(row, T - 1)
    else:
        t_idx = jax.lax.rem(row, T)
    c_idx = jax.lax.broadcasted_iota(jnp.int32, (1, C), 1)

    # Channels [0, fold): delay by s      -> out[t] = x[t - s]   for t >= s.
    fwd = pltpu.roll(x, shift=s, axis=0)
    out = jnp.where((c_idx < fold) & (t_idx >= s), fwd, x)

    # Channels [fold, 2*fold): advance by s -> out[t] = x[t + s] for t < T - s.
    bwd = pltpu.roll(x, shift=R - s, axis=0)
    out = jnp.where((c_idx >= fold) & (c_idx < 2 * fold) & (t_idx < T - s),
                    bwd, out)

    if long_fold > 0:
        # Channels [2*fold, 2*fold+long_fold): delay by 2 -> out[t] = x[t - 2].
        lng = pltpu.roll(x, shift=2 % R, axis=0)
        out = jnp.where((c_idx >= 2 * fold)
                        & (c_idx < 2 * fold + long_fold)
                        & (t_idx >= 2), lng, out)

    o_ref[...] = out


def _round_up(x, m):
    return ((x + m - 1) // m) * m


def temporal_shift(x, *, num_frames, n_head=1, n_div=8, divide_head=False,
                   shift_stride=1, long_shift_div=-1,
                   groups_per_block=None, shift_channels_only=True,
                   block_target_bytes=2 << 20):
    """Pallas equivalent of TemporalShift.forward (divide_head=False path)."""
    if divide_head:
        # TODO(synk): divide_head=True raises NotImplementedError in PyTorch too.
        raise NotImplementedError(
            "divide_head=True is not implemented (matches PyTorch).")
    del n_head  # unused on the non-divide_head path (matches PyTorch)

    n, bt, c = x.shape
    assert bt % num_frames == 0, "bt must be divisible by num_frames"
    assert 0 < shift_stride < num_frames, "need 0 < shift_stride < num_frames"

    groups = n * (bt // num_frames)          # independent frame groups
    fold = c // n_div
    long_fold = c // long_shift_div if long_shift_div > 0 else 0
    dtype_bytes = jnp.dtype(x.dtype).itemsize

    # Channel extent actually modified by the shift (optionally restrict I/O).
    shift_c = min(2 * fold + long_fold, c)
    if shift_channels_only and shift_c > 0:
        c_blk = min(_round_up(shift_c, 128), c)
    else:
        c_blk = c
    restrict = c_blk < c
    if restrict and c_blk % 128 != 0:        # (8,128) rule: mult of 128 or full
        c_blk, restrict = c, False

    # Rows-per-block: big enough to amortize the ~0.35 us/step overhead and hit
    # the HBM roofline, small enough for double-buffered VMEM on v7x, and keep
    # >= 2 grid steps so v7x's two TensorCores both get work.
    if groups_per_block is None:
        per_group = num_frames * c_blk * dtype_bytes
        groups_per_block = max(1, block_target_bytes // per_group)
        if groups >= 2:
            groups_per_block = min(groups_per_block, pl.cdiv(groups, 2))
    groups_per_block = int(min(groups_per_block, groups))

    # (8,128) rule on the sublane axis: when tiling, block rows must be a
    # multiple of 8 (or cover the full row extent).
    m0 = 8 // gcd(num_frames, 8)             # min groups so rows % 8 == 0
    if groups_per_block < groups:
        groups_per_block = max(m0, (groups_per_block // m0) * m0)
        if groups_per_block >= groups:
            groups_per_block = groups
    rows_per_block = groups_per_block * num_frames
    grid = (pl.cdiv(groups, groups_per_block),)

    # Flatten to 2-D: rows ordered (n, b, T) with T minor, channels on lanes.
    xr = x.reshape(groups * num_frames, c)

    kernel = functools.partial(
        _temporal_shift_kernel, num_frames=num_frames, fold=fold,
        shift_stride=shift_stride, long_fold=long_fold)

    block_bytes = rows_per_block * c_blk * dtype_bytes
    # 2 in + 2 out double-buffers + compute temporaries / headroom.
    vmem_limit = int(min(48 << 20, max(32 << 20, 10 * block_bytes + (4 << 20))))
    moved_bytes = 2 * groups * num_frames * c_blk * dtype_bytes  # read + write

    spec = pl.BlockSpec((rows_per_block, c_blk), lambda i: (i, 0))

    out = pl.pallas_call(
        kernel,
        out_shape=jax.ShapeDtypeStruct(xr.shape, x.dtype),
        grid=grid,
        in_specs=[spec],
        out_specs=spec,
        # When only a channel prefix is written, alias input->output so the
        # untouched channels keep their values with zero extra HBM traffic
        # (callers should jit + donate x to realize the full saving).
        input_output_aliases={0: 0} if restrict else {},
        compiler_params=pltpu.CompilerParams(
            dimension_semantics=("parallel",),
            vmem_limit_bytes=vmem_limit),
        cost_estimate=pl.CostEstimate(
            flops=0, transcendentals=0, bytes_accessed=moved_bytes),
    )(xr)

    return out.reshape(n, bt, c)


def temporal_shift_ref(x, *, num_frames, n_div=8, shift_stride=1,
                       long_shift_div=-1):
    """Pure-JAX reference mirroring the PyTorch forward."""
    n, bt, c = x.shape
    feat = x.reshape(n, bt // num_frames, num_frames, c)
    out = feat
    fold = c // n_div
    s = shift_stride
    out = out.at[:, :, s:, :fold].set(feat[:, :, :-s, :fold])
    out = out.at[:, :, :-s, fold:2 * fold].set(feat[:, :, s:, fold:2 * fold])
    if long_shift_div > 0:
        lf = c // long_shift_div
        out = out.at[:, :, 2:, 2 * fold:2 * fold + lf].set(
            feat[:, :, :-2, 2 * fold:2 * fold + lf])
    return out.reshape(n, bt, c)


if __name__ == "__main__":
    num_frames = 8
    batch = 2
    n = 4
    n_head = 4
    n_div = 8
    shift_stride = 1
    bt = batch * num_frames

    key = jax.random.PRNGKey(0)
    ok = True
    # (c, long_shift_div, shift_channels_only, dtype)
    configs = [
        (256, -1, True, jnp.float32),   # restricted-channel + aliased in-place
        (256, 4, True, jnp.float32),    # restricted path + long (stride-2) shift
        (256, -1, False, jnp.float32),  # full-channel path
        (64, 4, True, jnp.float32),     # c < 128 -> falls back to full-c block
        (256, 4, True, jnp.bfloat16),   # bf16 (sublane-packed) path
    ]
    for idx, (c, long_shift_div, shift_only, dt) in enumerate(configs):
        k = jax.random.fold_in(key, idx)
        x = jax.random.normal(k, (n, bt, c), dtype=jnp.float32).astype(dt)
        out = temporal_shift(
            x, num_frames=num_frames, n_head=n_head, n_div=n_div,
            divide_head=False, shift_stride=shift_stride,
            long_shift_div=long_shift_div, shift_channels_only=shift_only)
        out = jax.block_until_ready(out)
        ref = temporal_shift_ref(
            x, num_frames=num_frames, n_div=n_div,
            shift_stride=shift_stride, long_shift_div=long_shift_div)
        ok = ok and bool(jnp.array_equal(out, ref))

    print("KERNEL_OK" if ok else "KERNEL_MISMATCH")
</pallas_src>

<mosaic_0001>
module attributes {stable_mosaic.version = 11 : i64} {
  func.func @_temporal_shift_kernel(%arg0: i32, %arg1: memref<32x128xf32, #tpu.memory_space<vmem>>, %arg2: memref<32x128xf32, #tpu.memory_space<vmem>>) attributes {dimension_semantics = [#tpu.dimension_semantics<parallel>], iteration_bounds = array<i64: 2>, scalar_prefetch = 0 : i64, scratch_operands = 0 : i64, tpu.core_type = #tpu.core_type<tc>, window_params = [{transform_indices = @transform_0, window_bounds = array<i64: 32, 128>}, {transform_indices = @transform_1, window_bounds = array<i64: 32, 128>}]} {
    %c0 = arith.constant 0 : index
    %c0_0 = arith.constant 0 : index
    %0 = vector.load %arg1[%c0, %c0_0] : memref<32x128xf32, #tpu.memory_space<vmem>>, vector<32x128xf32>
    %1 = tpu.iota {dimensions = array<i32: 0>} : vector<32x1xi32>
    %c7_i32 = arith.constant 7 : i32
    %2 = vector.broadcast %c7_i32 : i32 to vector<32x1xi32>
    %3 = arith.andi %1, %2 : vector<32x1xi32>
    %4 = tpu.iota {dimensions = array<i32: 1>} : vector<1x128xi32>
    %c1_i32 = arith.constant 1 : i32
    %5 = tpu.dynamic_rotate %0 by %c1_i32 dim 0 : vector<32x128xf32>, i32 -> vector<32x128xf32>
    %c32_i32 = arith.constant 32 : i32
    %6 = vector.broadcast %c32_i32 : i32 to vector<1x128xi32>
    %7 = arith.cmpi slt, %4, %6 : vector<1x128xi32>
    %c1_i32_1 = arith.constant 1 : i32
    %8 = vector.broadcast %c1_i32_1 : i32 to vector<32x1xi32>
    %9 = arith.cmpi sge, %3, %8 : vector<32x1xi32>
    %10 = vector.broadcast %7 : vector<1x128xi1> to vector<32x128xi1>
    %11 = vector.broadcast %9 : vector<32x1xi1> to vector<32x128xi1>
    %12 = arith.andi %10, %11 : vector<32x128xi1>
    %13 = arith.select %12, %5, %0 : vector<32x128xi1>, vector<32x128xf32>
    %c31_i32 = arith.constant 31 : i32
    %14 = tpu.dynamic_rotate %0 by %c31_i32 dim 0 : vector<32x128xf32>, i32 -> vector<32x128xf32>
    %c32_i32_2 = arith.constant 32 : i32
    %15 = vector.broadcast %c32_i32_2 : i32 to vector<1x128xi32>
    %16 = arith.cmpi sge, %4, %15 : vector<1x128xi32>
    %c64_i32 = arith.constant 64 : i32
    %17 = vector.broadcast %c64_i32 : i32 to vector<1x128xi32>
    %18 = arith.cmpi slt, %4, %17 : vector<1x128xi32>
    %19 = arith.andi %16, %18 : vector<1x128xi1>
    %c7_i32_3 = arith.constant 7 : i32
    %20 = vector.broadcast %c7_i32_3 : i32 to vector<32x1xi32>
    %21 = arith.cmpi slt, %3, %20 : vector<32x1xi32>
    %22 = vector.broadcast %19 : vector<1x128xi1> to vector<32x128xi1>
    %23 = vector.broadcast %21 : vector<32x1xi1> to vector<32x128xi1>
    %24 = arith.andi %22, %23 : vector<32x128xi1>
    %25 = arith.select %24, %14, %13 : vector<32x128xi1>, vector<32x128xf32>
    %c0_4 = arith.constant 0 : index
    %c0_5 = arith.constant 0 : index
    %26 = vector.load %arg2[%c0_4, %c0_5] : memref<32x128xf32, #tpu.memory_space<vmem>>, vector<32x128xf32>
    tpu.vector_store %arg2[%c0_4, %c0_5], %25 {strides = array<i32>} : memref<32x128xf32, #tpu.memory_space<vmem>>, vector<32x128xf32>,
    return
  }
  func.func @transform_0(%arg0: i32) -> (i32, i32) {
    %c0_i32 = arith.constant 0 : i32
    %c0_i32_0 = arith.constant 0 : i32
    return %arg0, %c0_i32 : i32, i32
  }
  func.func @transform_1(%arg0: i32) -> (i32, i32) {
    %c0_i32 = arith.constant 0 : i32
    %c0_i32_0 = arith.constant 0 : i32
    return %arg0, %c0_i32 : i32, i32
  }
}

</mosaic_0001>

<llo_original>
// kernel: tpu_custom_call.1
$region0: #{tpu_custom_call.1}
  #allocation0 [shape = 'u32[]', space=smem, size = 0x4, offset = 0x4, fixed_abs, tag = 'smem constant byte address 0x4 - core index']
  #allocation1 [shape = 'u32[72,128]{1,0:T(1,128)}', space=vmem, size = 0x9000, scoped, tag = 'internal scratch']
  %s0 = inlined_call_operand.hbm [shape: f32[64,256], index: 0, kind: input, shape index: {}, may-alias: {0,1}]
  %s1 = inlined_call_operand.hbm [shape: f32[64,256], index: 1, kind: output, shape index: {}, may-alias: {0,1}]
  %s2 = sld [smem:[#allocation0]]
  $region41: #{tpu_custom_call.1} parent=0
    _
  %s4 = ssub.s32 1, %s2
  %s5 = scalar_select 0, %s4, %s2
  $region1: #{tpu_custom_call.1} parent=0
    #allocation2 [shape = 'u8[32768]{0}', space=vmem, size = 0x8000, scoped, tag = 'input window, operand 0']
    #allocation3 [shape = 's32[2]{0}', space=sflag, size = 0x8, scoped, tag = 'scoped memory for tpu_custom_call.1']
    #allocation4 [shape = 's32[2]{0}', space=sflag, size = 0x8, scoped, tag = 'scoped memory for tpu_custom_call.1']
    #allocation5 [shape = 'u8[32768]{0}', space=vmem, size = 0x8000, scoped, tag = 'output window, operand 0']
    %6 = vsyncpa [#allocation3], 0
    %s7 = scalar_lea.sflag [#allocation3], 1
    %8 = vsyncpa %s7, 0
    %9 = vsyncpa [#allocation4], 0
    %s10 = scalar_lea.sflag [#allocation4], 1
    %11 = vsyncpa %s10, 0
    loop: start=0, step=1, limit=4
    $region2: #{tpu_custom_call.1} parent=1 // loop_pre_header
      _
    $region3: #{tpu_custom_call.1} parent=1 // loop_header
      %s13 = sphi 0, %s17
      %p14 = scmp.ge.s32.totalorder %s13, 4
      %s23 = sphi 0, %s25
      %s26 = sphi 0, %s23
      %s27 = sphi 0, %s26
      %s43 = sphi 0, %s27
      %s49 = sphi 0, %s51
      %s52 = sphi 0, %s49
      %s53 = sphi 0, %s52
      %s69 = sphi 0, %s53
    $region4: #{tpu_custom_call.1} parent=1 // loop_header_branch
      %16 = sbr.rel (%p14) target = $region8
    $region5: #{tpu_custom_call.1} parent=1 // loop_body
      %s18 = ssub.s32 %s13, 1
      %s19 = ssub.s32 %s13, 2
      %s20 = sadd.s32 %s13, 1
      %s21 = ssub.s32 %s13, %s20
      %p22 = scmp.eq.s32.totalorder %s21, 0
      %s24 = sadd.s32 %s23, 1
      %s25 = scalar_select %p22, %s23, %s24
      %p28 = pneg %p22
      %p29 = scmp.eq.s32.totalorder %s13, 1
      %p30 = por %p28, %p29
      %p31 = scmp.ne.s32.totalorder %s23, %s26
      %p32 = scmp.eq.s32.totalorder %s13, 0
      %p33 = por %p31, %p32
      %p34 = scmp.ne.s32.totalorder %s23, %s26
      %p35 = scmp.eq.s32.totalorder %s18, 1
      %p36 = por %p34, %p35
      %p37 = scmp.ne.s32.totalorder %s26, %s27
      %p38 = scmp.eq.s32.totalorder %s18, 0
      %p39 = por %p37, %p38
      %p40 = scmp.ne.s32.totalorder %s26, %s27
      %p41 = scmp.eq.s32.totalorder %s19, 1
      %p42 = por %p40, %p41
      %p44 = scmp.ne.s32.totalorder %s27, %s43
      %p45 = scmp.eq.s32.totalorder %s19, 0
      %p46 = por %p44, %p45
      %s47 = ssub.s32 %s13, %s20
      %p48 = scmp.eq.s32.totalorder %s47, 0
      %s50 = sadd.s32 %s49, 1
      %s51 = scalar_select %p48, %s49, %s50
      %p54 = pneg %p48
      %p55 = scmp.eq.s32.totalorder %s13, 1
      %p56 = por %p54, %p55
      %p57 = scmp.ne.s32.totalorder %s49, %s52
      %p58 = scmp.eq.s32.totalorder %s13, 0
      %p59 = por %p57, %p58
      %p60 = scmp.ne.s32.totalorder %s49, %s52
      %p61 = scmp.eq.s32.totalorder %s18, 1
      %p62 = por %p60, %p61
      %p63 = scmp.ne.s32.totalorder %s52, %s53
      %p64 = scmp.eq.s32.totalorder %s18, 0
      %p65 = por %p63, %p64
      %p66 = scmp.ne.s32.totalorder %s52, %s53
      %p67 = scmp.eq.s32.totalorder %s19, 1
      %p68 = por %p66, %p67
      %p70 = scmp.ne.s32.totalorder %s53, %s69
      %p71 = scmp.eq.s32.totalorder %s19, 0
      %p72 = por %p70, %p71
      %p73 = scmp.le.s32.totalorder 1, %s13
      %p74 = scmp.lt.s32.totalorder %s13, 3
      %p75 = pnand %p73, %p74
      %p76 = pneg %p75
      // Predicated region
      $region9: #{tpu_custom_call.1} parent=5 // pred_check
        _
      $region10: #{tpu_custom_call.1} parent=5 // pred_check_branch
        %78 = sbr.rel (%p75) target = $region12
      $region11: #{tpu_custom_call.1} parent=5 // pred_region
        %s79 = ssub.s32 %s13, 1
      $region12: #{tpu_custom_call.1} parent=5 // pred_fallthru
        _
      %p80 = scmp.lt.s32.totalorder %s13, 2
      // Predicated region
      $region13: #{tpu_custom_call.1} parent=5 // pred_check
        %p81 = pneg %p80
      $region14: #{tpu_custom_call.1} parent=5 // pred_check_branch
        %83 = sbr.rel (%p81) target = $region16
      $region15: #{tpu_custom_call.1} parent=5 // pred_region
        // Predicated region
        $region17: #{tpu_custom_call.1} parent=15 // pred_check
          %p84 = pneg %p33
        $region18: #{tpu_custom_call.1} parent=15 // pred_check_branch
          %86 = sbr.rel (%p84) target = $region20
        $region19: #{tpu_custom_call.1} parent=15 // pred_region
          %s87 = sand.u32 %s23, 1
          %s88 = scalar_lea.sflag [#allocation3], %s87
          %s89 = sand.u32 %s23, 1
          %s90 = smul.addr %s89, 32
          %s91 = scalar_lea.vmem [#allocation2], %s90
          %s92 = smul.u32 4, %s13
          %94 = vsyncadd %s88, 0
          %s95 = smul.addr %s92, 2
          %s96 = smul.addr %s95, 8
          %s97 = scalar_lea.hbm %s0, %s96
          %s98 = sshll.u32 %s97, 4
          %s99 = int_to_ptr.hbm [resolvable:$true] %s98
          %s100 = sshll.u32 %s91, 4
          %s101 = int_to_ptr.vmem [resolvable:$true] %s100
          %106 = dma.hbm_to_vmem [thread:$0]  %s99, 512, %s101, %s88, 256, 128, 8
        $region20: #{tpu_custom_call.1} parent=15 // pred_fallthru
          _
      $region16: #{tpu_custom_call.1} parent=5 // pred_fallthru
        _
      %p107 = scmp.le.s32.totalorder 1, %s13
      %p108 = scmp.lt.s32.totalorder %s13, 3
      %p109 = pnand %p107, %p108
      %p110 = pneg %p109
      // Predicated region
      $region21: #{tpu_custom_call.1} parent=5 // pred_check
        _
      $region22: #{tpu_custom_call.1} parent=5 // pred_check_branch
        %112 = sbr.rel (%p109) target = $region24
      $region23: #{tpu_custom_call.1} parent=5 // pred_region
        %s113 = ssub.s32 %s13, 1
        %s114 = sand.u32 %s26, 1
        %s115 = scalar_lea.sflag [#allocation3], %s114
        %s116 = sand.u32 %s26, 1
        %s117 = smul.addr %s116, 32
        %s118 = scalar_lea.vmem [#allocation2], %s117
        // Predicated region
        $region25: #{tpu_custom_call.1} parent=23 // pred_check
          %p119 = pneg %p39
        $region26: #{tpu_custom_call.1} parent=23 // pred_check_branch
          %121 = sbr.rel (%p119) target = $region28
        $region27: #{tpu_custom_call.1} parent=23 // pred_region
          %123 = dma.done %s115, 512
        $region28: #{tpu_custom_call.1} parent=23 // pred_fallthru
          _
        %s124 = sand.u32 %s26, 1
        %s125 = scalar_lea.sflag [#allocation3], %s124
        %s126 = sand.u32 %s26, 1
        %s127 = smul.addr %s126, 32
        %s128 = scalar_lea.vmem [#allocation2], %s127
        %p129 = pneg %p39
        %p130 = pneg %p36
        %p131 = pneg %p65
        %p132 = pneg %p62
        %s133 = sand.u32 %s52, 1
        %s134 = scalar_lea.sflag [#allocation4], %s133
        %s135 = sand.u32 %s52, 1
        %s136 = smul.addr %s135, 32
        %s137 = scalar_lea.vmem [#allocation5], %s136
        %s138 = smul.u32 4, %s18
        %s139 = smul.u32 4, %s18
        %v140 = vld [vmem:[%s118] sm:$0xff]
        %v141 = vld [vmem:[%s118 + $0x8] sm:$0xff]
        %v142 = vld [vmem:[%s118 + $0x10] sm:$0xff]
        %v143 = vld [vmem:[%s118 + $0x18] sm:$0xff]
        %v144 = vlaneseq
        %v145 = vshrl.u32 %v144, 7
        %v146 = vadd.s32 %v145, 8
        %v147 = vadd.s32 %v145, 16
        %v148 = vadd.s32 %v145, 24
        %v149 = vand.u32 %v145, 7
        %v150 = vand.u32 %v146, 7
        %v151 = vand.u32 %v147, 7
        %v152 = vand.u32 %v148, 7
        %v153 = vlaneseq
        %v154 = vand.u32 %v153, 127
        %v155 = vrot.slane %v140, 7
        %v156 = vrot.slane %v141, 7
        %v157 = vrot.slane %v142, 7
        %v158 = vrot.slane %v143, 7
        %vm159 = vcmp.lt.s32.totalorder %v145, 1
        %v160 = vsel %vm159, %v157, %v158
        %v161 = vsel %vm159, %v156, %v157
        %v162 = vsel %vm159, %v155, %v156
        %v163 = vsel %vm159, %v158, %v155
        %vm164 = vcmp.lt.s32.totalorder %v154, 32
        %vm165 = vcmp.ge.s32.totalorder %v149, 1
        %vm166 = vcmp.ge.s32.totalorder %v150, 1
        %vm167 = vcmp.ge.s32.totalorder %v151, 1
        %vm168 = vcmp.ge.s32.totalorder %v152, 1
        %v169 = vsel %vm164, 1, 0
        %vm170 = vcmp.eq.s32.totalorder %v169, 1
        %v171 = vsel %vm165, 1, 0
        %v172 = vsel %vm166, 1, 0
        %v173 = vsel %vm167, 1, 0
        %v174 = vsel %vm168, 1, 0
        %vm175 = vcmp.eq.s32.totalorder %v171, 1
        %vm176 = vcmp.eq.s32.totalorder %v172, 1
        %vm177 = vcmp.eq.s32.totalorder %v173, 1
        %vm178 = vcmp.eq.s32.totalorder %v174, 1
        %vm179 = vmand %vm170, %vm175
        %vm180 = vmand %vm170, %vm176
        %vm181 = vmand %vm170, %vm177
        %vm182 = vmand %vm170, %vm178
        %v183 = vsel %vm179, %v163, %v140
        %v184 = vsel %vm180, %v162, %v141
        %v185 = vsel %vm181, %v161, %v142
        %v186 = vsel %vm182, %v160, %v143
        %v187 = vrot.slane %v140, 1
        %v188 = vrot.slane %v141, 1
        %v189 = vrot.slane %v142, 1
        %v190 = vrot.slane %v143, 1
        %vm191 = vcmp.lt.s32.totalorder %v145, 7
        %v192 = vsel %vm191, %v189, %v190
        %v193 = vsel %vm191, %v188, %v189
        %v194 = vsel %vm191, %v187, %v188
        %v195 = vsel %vm191, %v190, %v187
        %vm196 = vcmp.ge.s32.totalorder %v154, 32
        %vm197 = vcmp.lt.s32.totalorder %v154, 64
        %vm198 = vmand %vm196, %vm197
        %vm199 = vcmp.lt.s32.totalorder %v149, 7
        %vm200 = vcmp.lt.s32.totalorder %v150, 7
        %vm201 = vcmp.lt.s32.totalorder %v151, 7
        %vm202 = vcmp.lt.s32.totalorder %v152, 7
        %v203 = vsel %vm198, 1, 0
        %vm204 = vcmp.eq.s32.totalorder %v203, 1
        %v205 = vsel %vm199, 1, 0
        %v206 = vsel %vm200, 1, 0
        %v207 = vsel %vm201, 1, 0
        %v208 = vsel %vm202, 1, 0
        %vm209 = vcmp.eq.s32.totalorder %v205, 1
        %vm210 = vcmp.eq.s32.totalorder %v206, 1
        %vm211 = vcmp.eq.s32.totalorder %v207, 1
        %vm212 = vcmp.eq.s32.totalorder %v208, 1
        %vm213 = vmand %vm204, %vm209
        %vm214 = vmand %vm204, %vm210
        %vm215 = vmand %vm204, %vm211
        %vm216 = vmand %vm204, %vm212
        %v217 = vsel %vm213, %v194, %v183
        %v218 = vsel %vm214, %v193, %v184
        %v219 = vsel %vm215, %v192, %v185
        %v220 = vsel %vm216, %v195, %v186
        %221 = vst [vmem:[%s137] sm:$0xff] %v217
        %222 = vst [vmem:[%s137 + $0x8] sm:$0xff] %v218
        %223 = vst [vmem:[%s137 + $0x10] sm:$0xff] %v219
        %224 = vst [vmem:[%s137 + $0x18] sm:$0xff] %v220
        %s225 = sand.u32 %s52, 1
        %s226 = scalar_lea.sflag [#allocation4], %s225
        %s227 = sand.u32 %s52, 1
        %s228 = smul.addr %s227, 32
        %s229 = scalar_lea.vmem [#allocation5], %s228
        // Predicated region
        $region29: #{tpu_custom_call.1} parent=23 // pred_check
          %p230 = pneg %p62
        $region30: #{tpu_custom_call.1} parent=23 // pred_check_branch
          %232 = sbr.rel (%p230) target = $region32
        $region31: #{tpu_custom_call.1} parent=23 // pred_region
          %s233 = smul.u32 4, %s18
          %235 = vsyncadd %s226, 0
          %s236 = smul.addr %s233, 2
          %s237 = smul.addr %s236, 8
          %s238 = scalar_lea.hbm %s1, %s237
          %s239 = sshll.u32 %s229, 4
          %s240 = int_to_ptr.vmem [resolvable:$true] %s239
          %s241 = sshll.u32 %s238, 4
          %s242 = int_to_ptr.hbm [resolvable:$true] %s241
          %247 = dma.vmem_to_hbm [thread:$0]  %s240, 512, %s242, %s226, 128, 256, 8
        $region32: #{tpu_custom_call.1} parent=23 // pred_fallthru
          _
      $region24: #{tpu_custom_call.1} parent=5 // pred_fallthru
        _
      %p248 = scmp.le.s32.totalorder 2, %s13
      // Predicated region
      $region33: #{tpu_custom_call.1} parent=5 // pred_check
        %p249 = pneg %p248
      $region34: #{tpu_custom_call.1} parent=5 // pred_check_branch
        %251 = sbr.rel (%p249) target = $region36
      $region35: #{tpu_custom_call.1} parent=5 // pred_region
        %s252 = ssub.s32 %s13, 2
        // Predicated region
        $region37: #{tpu_custom_call.1} parent=35 // pred_check
          %p253 = pneg %p68
        $region38: #{tpu_custom_call.1} parent=35 // pred_check_branch
          %255 = sbr.rel (%p253) target = $region40
        $region39: #{tpu_custom_call.1} parent=35 // pred_region
          %s256 = sand.u32 %s53, 1
          %s257 = scalar_lea.sflag [#allocation4], %s256
          %s258 = sand.u32 %s53, 1
          %s259 = smul.addr %s258, 32
          %s260 = scalar_lea.vmem [#allocation5], %s259
          %262 = dma.done %s257, 512
        $region40: #{tpu_custom_call.1} parent=35 // pred_fallthru
          _
      $region36: #{tpu_custom_call.1} parent=5 // pred_fallthru
        _
    $region6: #{tpu_custom_call.1} parent=1 // loop_footer
      %s17 = sadd.s32 1, %s13
    $region7: #{tpu_custom_call.1} parent=1 // loop_footer_branch
      %12 = sbr.rel target = $region3
    $region8: #{tpu_custom_call.1} parent=1 // loop_exit
      _
    %263 = vsyncpa [#allocation3], 1
    %s264 = scalar_lea.sflag [#allocation3], 1
    %265 = vsyncpa %s264, 1
    %266 = vsyncpa [#allocation4], 1
    %s267 = scalar_lea.sflag [#allocation4], 1
    %268 = vsyncpa %s267, 1

</llo_original>
